<compile_context>
chip_gen: v7x
topology: tpu7x:2x2x1
jax: 0.10.0
libtpu: 0.0.40
codegen_flags: <defaults>
</compile_context>

<pallas_src>
import jax
import jax.numpy as jnp
from jax import lax
from jax.experimental import pallas as pl
from jax.experimental.pallas import tpu as pltpu


def _round_up(x, m):
    return (x + m - 1) // m * m


def _vmem_limit_bytes():
    """VMEM budget = physical capacity minus headroom for compiler scratch
    and pipeline double-buffers.  ~112 MiB on v5e/v6e, ~48 MiB on v7x."""
    try:
        cap = pltpu.get_tpu_info().vmem_capacity_bytes
    except Exception:
        cap = 64 * 1024 * 1024          # conservative fallback (v7x-safe)
    return int(max(cap - 16 * 1024 * 1024, 32 * 1024 * 1024))


def _mlp_fused_kernel(x_ref, w_ref, b_ref, o_ref):
    # Fused Linear(+folded BN): y = x @ W' + b'   (bf16 inputs, f32 accumulate)
    y = jnp.dot(x_ref[...], w_ref[...], preferred_element_type=jnp.float32)
    y = y + b_ref[...]                       # (1, out_p) broadcasts over rows
    # SiLU: y * sigmoid(y); keep the divide on the EUP approx path.
    sig = pl.reciprocal(1.0 + jnp.exp(-y), approx=True)
    # Dropout(p=0) is the identity.
    o_ref[...] = (y * sig).astype(o_ref.dtype)


def fold_bn_into_linear(w_t, b, gamma, beta, running_mean, running_var,
                        eps=1e-5, *, pad_out_to=128,
                        matmul_dtype=jnp.bfloat16):
    """One-time parameter prep (do this OUTSIDE the hot path):

      scale = gamma / sqrt(var + eps)
      W'    = W_t * scale          (W_t is (in, out))
      b'    = (b - mean) * scale + beta

    The out-feature axis is zero-padded to a multiple of `pad_out_to`
    (lane-dense stores; use 256 on v6e/v7x for compute-bound layer sizes)
    and W' is cast to `matmul_dtype` (bf16) for the MXU.  Padded columns have
    W'=0, b'=0 -> SiLU(0)=0, so they are numerically inert and sliced off.
    """
    scale = gamma * lax.rsqrt(running_var + eps)       # (1, out)
    w_fused = w_t * scale                              # (in, out)
    b_fused = (b - running_mean) * scale + beta        # (1, out)

    out = w_fused.shape[1]
    out_p = _round_up(out, pad_out_to)
    if out_p != out:
        w_fused = jnp.pad(w_fused, ((0, 0), (0, out_p - out)))
        b_fused = jnp.pad(b_fused, ((0, 0), (0, out_p - out)))

    return w_fused.astype(matmul_dtype), b_fused.astype(jnp.float32)


def _pick_tm(n, tm_max):
    # Row tile: multiple of 8 sublanes, capped at the requested maximum and
    # never much larger than the batch itself.
    tm = min(tm_max, _round_up(n, 8))
    # v7x megacore: give the "parallel" batch axis >= 2 grid steps when the
    # batch is big enough to split, so both TensorCores get work.
    if pl.cdiv(n, tm) == 1 and n >= 32:
        tm = _round_up(pl.cdiv(n, 2), 16)
    return tm


def mlp_layer(x, w_fused, b_fused, out_features=None, *, tm=512):
    """x: (N, in), w_fused: (in, out_p) bf16, b_fused: (1, out_p) f32.

    Returns (N, out_features) f32.  `out_features` defaults to out_p (no
    column slice).
    """
    n, k = x.shape
    out_p = w_fused.shape[1]
    if out_features is None:
        out_features = out_p

    # bf16 matmul operands (f32 accumulation happens inside the kernel).
    x_mm = x if x.dtype == jnp.bfloat16 else x.astype(jnp.bfloat16)

    tm = _pick_tm(n, tm)
    grid = (pl.cdiv(n, tm),)   # partial trailing block is masked by Pallas

    y = pl.pallas_call(
        _mlp_fused_kernel,
        out_shape=jax.ShapeDtypeStruct((n, out_p), jnp.float32),
        grid_spec=pltpu.PrefetchScalarGridSpec(
            num_scalar_prefetch=0,
            grid=grid,
            in_specs=[
                # x tile marches over the batch axis.
                pl.BlockSpec((tm, k), lambda i: (i, 0)),
                # Weight / bias blocks have constant indices -> stay resident
                # in VMEM across grid steps (no re-DMA).
                pl.BlockSpec((k, out_p), lambda i: (0, 0)),
                pl.BlockSpec((1, out_p), lambda i: (0, 0)),
            ],
            out_specs=pl.BlockSpec((tm, out_p), lambda i: (i, 0)),
        ),
        compiler_params=pltpu.CompilerParams(
            dimension_semantics=("parallel",),
            vmem_limit_bytes=_vmem_limit_bytes(),
        ),
    )(x_mm, w_fused, b_fused)

    return y if out_p == out_features else y[:, :out_features]


if __name__ == "__main__":
    key = jax.random.PRNGKey(0)
    k_x, k_w, k_b, k_g, k_bt, k_m, k_v = jax.random.split(key, 7)

    batch = 8
    input_length = 32
    output_length = 64

    # Input
    x = jax.random.normal(k_x, (batch, input_length), dtype=jnp.float32)

    # nn.Linear(input_length, output_length) parameters, stored pre-transposed
    # as (in, out) so the kernel does x @ W_t directly.
    w_t = (jax.random.normal(k_w, (input_length, output_length),
                             dtype=jnp.float32) * 0.1)
    b = jax.random.normal(k_b, (1, output_length), dtype=jnp.float32) * 0.1

    # nn.BatchNorm1d(output_length) parameters + running stats (eval mode).
    gamma = 1.0 + 0.1 * jax.random.normal(k_g, (1, output_length),
                                          dtype=jnp.float32)
    beta = 0.1 * jax.random.normal(k_bt, (1, output_length), dtype=jnp.float32)
    running_mean = 0.1 * jax.random.normal(k_m, (1, output_length),
                                           dtype=jnp.float32)
    running_var = jnp.abs(
        1.0 + 0.1 * jax.random.normal(k_v, (1, output_length),
                                      dtype=jnp.float32))

    # One-time parameter prep: fold BN, pad out-features, cast W' to bf16.
    w_fused, b_fused = fold_bn_into_linear(w_t, b, gamma, beta,
                                           running_mean, running_var)

    out = mlp_layer(x, w_fused, b_fused, out_features=output_length)
    out = jax.block_until_ready(out)

    # Reference check in plain JAX f32 (un-fused math: Linear -> BN -> SiLU).
    # Tolerance loosened for the bf16 matmul operands.
    y_ref = x @ w_t + b
    y_ref = (y_ref - running_mean) * lax.rsqrt(running_var + 1e-5) * gamma + beta
    y_ref = y_ref * jax.nn.sigmoid(y_ref)
    assert out.shape == (batch, output_length)
    assert jnp.allclose(out, y_ref, atol=2e-2, rtol=2e-2)

    # TODO(synk): BatchNorm1d training-mode batch statistics / running-stat
    # updates are not implemented (inference semantics only).

    print("KERNEL_OK")
</pallas_src>

<mosaic_0001>
module attributes {stable_mosaic.version = 11 : i64} {
  func.func @_mlp_fused_kernel(%arg0: i32, %arg1: memref<8x32xbf16, #tpu.memory_space<vmem>>, %arg2: memref<32x128xbf16, #tpu.memory_space<vmem>>, %arg3: memref<1x128xf32, #tpu.memory_space<vmem>>, %arg4: memref<8x128xf32, #tpu.memory_space<vmem>>) attributes {dimension_semantics = [#tpu.dimension_semantics<parallel>], iteration_bounds = array<i64: 1>, scalar_prefetch = 0 : i64, scratch_operands = 0 : i64, tpu.core_type = #tpu.core_type<tc>, window_params = [{transform_indices = @transform_0, window_bounds = array<i64: 8, 32>}, {pipeline_mode = #tpu.pipeline_mode<synchronous>, transform_indices = @transform_1, window_bounds = array<i64: 32, 128>}, {pipeline_mode = #tpu.pipeline_mode<synchronous>, transform_indices = @transform_2, window_bounds = array<i64: 1, 128>}, {transform_indices = @transform_3, window_bounds = array<i64: 8, 128>}]} {
    %c0 = arith.constant 0 : index
    %c0_0 = arith.constant 0 : index
    %0 = vector.load %arg1[%c0, %c0_0] : memref<8x32xbf16, #tpu.memory_space<vmem>>, vector<8x32xbf16>
    %c0_1 = arith.constant 0 : index
    %c0_2 = arith.constant 0 : index
    %1 = vector.load %arg2[%c0_1, %c0_2] : memref<32x128xbf16, #tpu.memory_space<vmem>>, vector<32x128xbf16>
    %cst = arith.constant dense<0.000000e+00> : vector<8x128xf32>
    %2 = tpu.matmul %0, %1, %cst {dimension_numbers = #tpu.dot_dimension_numbers<[1], [0], [0], [1], [0, 0, 1, 1], [], []>} : vector<8x32xbf16>, vector<32x128xbf16>, vector<8x128xf32> -> vector<8x128xf32>
    %c0_3 = arith.constant 0 : index
    %c0_4 = arith.constant 0 : index
    %3 = vector.load %arg3[%c0_3, %c0_4] : memref<1x128xf32, #tpu.memory_space<vmem>>, vector<1x128xf32>
    %4 = vector.broadcast %3 : vector<1x128xf32> to vector<8x128xf32>
    %5 = arith.addf %2, %4 : vector<8x128xf32>
    %cst_5 = arith.constant 0.000000e+00 : f32
    %6 = vector.broadcast %cst_5 : f32 to vector<8x128xf32>
    %7 = arith.subf %6, %5 : vector<8x128xf32>
    %8 = math.exp %7 : vector<8x128xf32>
    %cst_6 = arith.constant 1.000000e+00 : f32
    %9 = vector.broadcast %cst_6 : f32 to vector<8x128xf32>
    %10 = arith.addf %9, %8 : vector<8x128xf32>
    %11 = tpu.reciprocal %10 {approx = true} : vector<8x128xf32> -> vector<8x128xf32>
    %12 = arith.mulf %5, %11 : vector<8x128xf32>
    %c0_7 = arith.constant 0 : index
    %c0_8 = arith.constant 0 : index
    %13 = vector.load %arg4[%c0_7, %c0_8] : memref<8x128xf32, #tpu.memory_space<vmem>>, vector<8x128xf32>
    tpu.vector_store %arg4[%c0_7, %c0_8], %12 {strides = array<i32>} : memref<8x128xf32, #tpu.memory_space<vmem>>, vector<8x128xf32>,
    return
  }
  func.func @transform_0(%arg0: i32) -> (i32, i32) {
    %c0_i32 = arith.constant 0 : i32
    %c0_i32_0 = arith.constant 0 : i32
    return %arg0, %c0_i32 : i32, i32
  }
  func.func @transform_1(%arg0: i32) -> (i32, i32) {
    %c0_i32 = arith.constant 0 : i32
    %c0_i32_0 = arith.constant 0 : i32
    %c0_i32_1 = arith.constant 0 : i32
    return %c0_i32, %c0_i32_0 : i32, i32
  }
  func.func @transform_2(%arg0: i32) -> (i32, i32) {
    %c0_i32 = arith.constant 0 : i32
    %c0_i32_0 = arith.constant 0 : i32
    %c0_i32_1 = arith.constant 0 : i32
    return %c0_i32, %c0_i32_0 : i32, i32
  }
  func.func @transform_3(%arg0: i32) -> (i32, i32) {
    %c0_i32 = arith.constant 0 : i32
    %c0_i32_0 = arith.constant 0 : i32
    return %arg0, %c0_i32 : i32, i32
  }
}

</mosaic_0001>

<llo_original>
// kernel: tpu_custom_call.1
$region0: #{tpu_custom_call.1}
  #allocation0 [shape = 'u32[]', space=smem, size = 0x4, offset = 0x4, fixed_abs, tag = 'smem constant byte address 0x4 - core index']
  #allocation1 [shape = 'u32[144,128]{1,0:T(1,128)}', space=vmem, size = 0x12000, scoped, tag = 'internal scratch']
  %s0 = inlined_call_operand.hbm [shape: bf16[8,32], index: 0, kind: input, shape index: {}]
  %s1 = inlined_call_operand.hbm [shape: bf16[32,128], index: 1, kind: input, shape index: {}]
  %s2 = inlined_call_operand.vmem [shape: f32[1,128], index: 2, kind: input, shape index: {}]
  %s3 = inlined_call_operand.hbm [shape: f32[8,128], index: 3, kind: output, shape index: {}]
  %s4 = sld [smem:[#allocation0]]
  $region30: #{tpu_custom_call.1} parent=0
    _
  %s6 = ssub.s32 1, %s4
  %s7 = scalar_select 0, %s6, %s4
  $region1: #{tpu_custom_call.1} parent=0
    #allocation2 [shape = 'u8[2048]{0}', space=vmem, size = 0x800, scoped, tag = 'input window, operand 0, single buffered']
    #allocation3 [shape = 's32[1]{0}', space=sflag, size = 0x4, scoped, tag = 'scoped memory for tpu_custom_call.1']
    #allocation4 [shape = 's32[1]{0}', space=sflag, size = 0x4, scoped, tag = 'scoped memory for tpu_custom_call.1']
    #allocation5 [shape = 'u8[8192]{0}', space=vmem, size = 0x2000, scoped, tag = 'input window, operand 1, single buffered']
    #allocation6 [shape = 's32[1]{0}', space=sflag, size = 0x4, scoped, tag = 'scoped memory for tpu_custom_call.1']
    #allocation7 [shape = 'u8[4096]{0}', space=vmem, size = 0x1000, scoped, tag = 'output window, operand 0, single buffered']
    %8 = vsyncpa [#allocation3], 0
    %9 = vsyncpa [#allocation6], 0
    %10 = vsyncpa [#allocation4], 0
    // Predicated region
    $region2: #{tpu_custom_call.1} parent=1 // pred_check
      _
    $region3: #{tpu_custom_call.1} parent=1 // pred_check_branch
      %12 = sbr.rel (0) target = $region5
    $region4: #{tpu_custom_call.1} parent=1 // pred_region
      %s14 = ssub.s32 64, 64
      %15 = vsyncadd [#allocation3], %s14
      %s17 = sshll.u32 [#allocation2], 4
      %s18 = int_to_ptr.vmem [resolvable:$true] %s17
      %20 = dma.hbm_to_vmem [thread:$0]  %s0, 64, %s18, [#allocation3]
    $region5: #{tpu_custom_call.1} parent=1 // pred_fallthru
      _
    // Predicated region
    $region6: #{tpu_custom_call.1} parent=1 // pred_check
      _
    $region7: #{tpu_custom_call.1} parent=1 // pred_check_branch
      %22 = sbr.rel (0) target = $region9
    $region8: #{tpu_custom_call.1} parent=1 // pred_region
      %s24 = ssub.s32 256, 256
      %25 = vsyncadd [#allocation6], %s24
      %s26 = sshll.u32 [#allocation5], 4
      %s27 = int_to_ptr.vmem [resolvable:$true] %s26
      %32 = dma.hbm_to_vmem [thread:$0]  %s1, 256, %s27, [#allocation6], 64, 64, 4
    $region9: #{tpu_custom_call.1} parent=1 // pred_fallthru
      _
    // Predicated region
    $region10: #{tpu_custom_call.1} parent=1 // pred_check
      _
    $region11: #{tpu_custom_call.1} parent=1 // pred_check_branch
      %34 = sbr.rel (0) target = $region13
    $region12: #{tpu_custom_call.1} parent=1 // pred_region
      _
    $region13: #{tpu_custom_call.1} parent=1 // pred_fallthru
      _
    // Predicated region
    $region14: #{tpu_custom_call.1} parent=1 // pred_check
      _
    $region15: #{tpu_custom_call.1} parent=1 // pred_check_branch
      %36 = sbr.rel (0) target = $region17
    $region16: #{tpu_custom_call.1} parent=1 // pred_region
      %37 = dma.done [#allocation3], 64
    $region17: #{tpu_custom_call.1} parent=1 // pred_fallthru
      _
    // Predicated region
    $region18: #{tpu_custom_call.1} parent=1 // pred_check
      _
    $region19: #{tpu_custom_call.1} parent=1 // pred_check_branch
      %39 = sbr.rel (0) target = $region21
    $region20: #{tpu_custom_call.1} parent=1 // pred_region
      %40 = dma.done [#allocation6], 256
    $region21: #{tpu_custom_call.1} parent=1 // pred_fallthru
      _
    %v42 = vld [vmem:[#allocation2] sm:$0xf]
    %v43 = vld [vmem:[#allocation5] sm:$0xf]
    %v44 = vld [vmem:[#allocation5 + $0x4] sm:$0xf]
    %v45 = vld [vmem:[#allocation5 + $0x8] sm:$0xf]
    %v46 = vld [vmem:[#allocation5 + $0xc] sm:$0xf]
    %v47 = vld [vmem:[%s2] sm:$0x1]
    %v49 = vlaneseq
    %v50 = vshrl.u32 %v49, 7
    %v51 = vsub.s32 0, %v50
    %v52 = vrot.slane %v47, %v51
    %v58 = vunpack.c.l.b16 %v43
    %v59 = vunpack.c.l.b16 %v44
    %v60 = vunpack.c.l.b16 %v45
    %v61 = vunpack.c.l.b16 %v46
    %v62 = vpack.c.b16 %v59, %v58
    %v63 = vpack.c.b16 %v61, %v60
    %vm66 = vcmask 261120
    %v68 = vsel %vm66, %v42, 0
    %70 = vmatprep.subr.bf16.mxu0 0
    %71 = vmatpush1.bf16.msra.mxu0 %v62
    %72 = vmatprep.subr.bf16.mxu0 0
    %73 = vmatpush1.bf16.msra.mxu0 %v63
    %74 = vmatprep.subr.bf16.mxu0 0
    %75 = vmatpush1.bf16.msra.mxu0 0
    %76 = vmatprep.subr.bf16.mxu0 0
    %77 = vmatpush1.bf16.msra.mxu0 0
    %78 = vmatprep.subr.bf16.mxu0 0
    %79 = vmatpush1.bf16.msra.mxu0 0
    %80 = vmatprep.subr.bf16.mxu0 0
    %81 = vmatpush1.bf16.msra.mxu0 0
    %82 = vmatprep.subr.bf16.mxu0 0
    %83 = vmatpush1.bf16.msra.mxu0 0
    %84 = vmatprep.subr.bf16.mxu0 0
    %85 = vmatpush1.bf16.msra.mxu0 0
    %86 = vmatprep.subr.bf16.mxu0 0
    %87 = vmatpush1.bf16.msra.mxu0 0
    %88 = vmatprep.subr.bf16.mxu0 0
    %89 = vmatpush1.bf16.msra.mxu0 0
    %90 = vmatprep.subr.bf16.mxu0 0
    %91 = vmatpush1.bf16.msra.mxu0 0
    %92 = vmatprep.subr.bf16.mxu0 0
    %93 = vmatpush1.bf16.msra.mxu0 0
    %94 = vmatprep.subr.bf16.mxu0 0
    %95 = vmatpush1.bf16.msra.mxu0 0
    %96 = vmatprep.subr.bf16.mxu0 0
    %97 = vmatpush1.bf16.msra.mxu0 0
    %98 = vmatprep.subr.bf16.mxu0 0
    %99 = vmatpush1.bf16.msra.mxu0 0
    %100 = vmatprep.subr.bf16.mxu0 0
    %101 = vmatpush1.bf16.msra.mxu0 0
    %102 = vmatprep.mubr.bf16.mxu0 0
    %103 = vmatmul.mubr.bf16.gmra.mrb[0].mxu0 %v68
    %v104 = vpop.f32.mrb[0].mxu0
    %v105 = vadd.f32 %v52, %v104
    %v106 = vpop.f32.mrb[0].mxu0
    %v107 = vpop.f32.mrb[0].mxu0
    %v108 = vpop.f32.mrb[0].mxu0
    %109 = vdwg.mxu0
    %v110 = vsub.f32 0.0, %v105
    %v111 = vmul.f32 %v110, 1.442695
    %v112 = vpow.pop %v111
    %v113 = vadd.f32 %v112, 1.0
    %v114 = vrcp.pop %v113
    %v115 = vmul.f32 %v105, %v114
    %116 = vst [vmem:[#allocation7] sm:$0xff] %v115
    // Predicated region
    $region22: #{tpu_custom_call.1} parent=1 // pred_check
      _
    $region23: #{tpu_custom_call.1} parent=1 // pred_check_branch
      %118 = sbr.rel (0) target = $region25
    $region24: #{tpu_custom_call.1} parent=1 // pred_region
      %s120 = ssub.s32 128, 128
      %121 = vsyncadd [#allocation4], %s120
      %s123 = sshll.u32 [#allocation7], 4
      %s124 = int_to_ptr.vmem [resolvable:$true] %s123
      %126 = dma.vmem_to_hbm [thread:$0]  %s124, 128, %s3, [#allocation4]
    $region25: #{tpu_custom_call.1} parent=1 // pred_fallthru
      _
    // Predicated region
    $region26: #{tpu_custom_call.1} parent=1 // pred_check
      _
    $region27: #{tpu_custom_call.1} parent=1 // pred_check_branch
      %128 = sbr.rel (0) target = $region29
    $region28: #{tpu_custom_call.1} parent=1 // pred_region
      %129 = dma.done [#allocation4], 128
    $region29: #{tpu_custom_call.1} parent=1 // pred_fallthru
      _
    %130 = vsyncpa [#allocation3], 1
    %131 = vsyncpa [#allocation6], 1
    %132 = vsyncpa [#allocation4], 1

</llo_original>
